<compile_context>
chip_gen: v6e
topology: v6e:2x2x1
jax: 0.10.0
libtpu: 0.0.40
codegen_flags: <defaults>
</compile_context>

<pallas_src>
import jax
import jax.numpy as jnp
from jax.experimental import pallas as pl
from jax.experimental.pallas import tpu as pltpu

LANE = 128        # TPU vreg lane width (output slab width)
SUBLANE = 8       # f32 sublane count
ROW_TILE = 256    # batch rows per grid step = MXU row tile on v6e/v7x
NEG_INF = -1e30   # f32 sentinel for masked lanes (kept in f32, never cast to bf16)


def _round_up(x, m):
    return ((x + m - 1) // m) * m


def actor_critic_kernel(x_ref, w1_ref, b1_ref, w2_ref, b2_ref, out_ref):
    """Fused critic + actor forward on one (TB, 128) output tile.

    x_ref   : (TB, S_pad)      f32 zero-padded states
    w1_ref  : (S_pad, 2*H_pad) [critic_l1 | actor_l1] packed side by side (bf16 or f32)
    b1_ref  : (1, 2*H_pad)     f32
    w2_ref  : (2*H_pad, 128)   block-diag: col 0 = critic_l2, cols 1..A = actor_l2
    b2_ref  : (1, 128)         f32; lanes [1+A, 128) pre-filled with NEG_INF
    out_ref : (TB, 128)        lane 0 = value, lanes 1..A = softmax policy
    """
    # Layer 1 for both heads in ONE MXU pass (bf16 operands, f32 accumulate).
    x = x_ref[...].astype(w1_ref.dtype)
    h = jnp.dot(x, w1_ref[...], preferred_element_type=jnp.float32) + b1_ref[...]
    h = jnp.maximum(h, 0.0)                 # padded lanes: 0-weight, 0-bias -> relu(0)=0

    # Layer 2 for both heads in ONE MXU pass via block-diagonal packing.
    y = jnp.dot(h.astype(w2_ref.dtype), w2_ref[...],
                preferred_element_type=jnp.float32) + b2_ref[...]

    # Lane 0 holds the critic value; padded action lanes already carry a -1e30
    # bias (baked in at pack time) so exp underflows there. Only lane 0 needs
    # masking before the softmax.
    lane0 = jax.lax.broadcasted_iota(jnp.int32, y.shape, 1) == 0
    logits = jnp.where(lane0, NEG_INF, y)
    m = jnp.max(logits, axis=-1, keepdims=True)
    e = jnp.exp(logits - m)
    policy = e / jnp.sum(e, axis=-1, keepdims=True)   # exact divide: rows sum to 1

    # One lane-dense (TB, 128) slab -> unmasked vst, single writeback DMA.
    out_ref[...] = jnp.where(lane0, y, policy)


@jax.jit
def actor_critic_forward_padded(x_padded, packed):
    """Hot-path forward. x_padded: (B_pad, S_pad) f32 (pre-padded, see pad_state).
    Returns the full (B_pad, 128) slab: lane 0 = value, lanes 1..n_actions = policy."""
    B_pad, S_pad = x_padded.shape
    TB = B_pad if B_pad <= ROW_TILE else ROW_TILE
    assert B_pad % TB == 0, "pad the batch with pad_state() first"
    full = lambda i: (0, 0)   # weights/biases: constant block index -> stay VMEM-resident

    return pl.pallas_call(
        actor_critic_kernel,
        out_shape=jax.ShapeDtypeStruct((B_pad, LANE), jnp.float32),
        grid=(B_pad // TB,),
        in_specs=[
            pl.BlockSpec((TB, S_pad), lambda i: (i, 0)),
            pl.BlockSpec(packed["w1"].shape, full),
            pl.BlockSpec(packed["b1"].shape, full),
            pl.BlockSpec(packed["w2"].shape, full),
            pl.BlockSpec(packed["b2"].shape, full),
        ],
        out_specs=pl.BlockSpec((TB, LANE), lambda i: (i, 0)),
        compiler_params=pltpu.CompilerParams(dimension_semantics=("parallel",)),
    )(x_padded, packed["w1"], packed["b1"], packed["w2"], packed["b2"])


# ---------------------------------------------------------------------------
# Cold-path helpers (kept OUT of the hot inference loop per the perf review).
# ---------------------------------------------------------------------------

def pad_state(state, n_states):
    """(B, n_states) or (n_states,) -> zero-padded (B_pad, S_pad) f32 slab."""
    state = jnp.asarray(state, jnp.float32)
    if state.ndim == 1:                      # mirrors torch .unsqueeze(0)
        state = state[None, :]
    B = state.shape[0]
    S_pad = _round_up(n_states, SUBLANE)
    B_pad = _round_up(B, SUBLANE) if B <= ROW_TILE else _round_up(B, ROW_TILE)
    return jnp.zeros((B_pad, S_pad), jnp.float32).at[:B, :n_states].set(state)


def unpack_output(slab, batch, n_actions):
    """Slice the (B_pad, 128) slab into (value, policy). Rows >= batch are padding."""
    return slab[:batch, 0:1], slab[:batch, 1:1 + n_actions]


def init_params(key, n_states, n_actions, hidden_dim):
    """PyTorch nn.Linear default init U(-1/sqrt(fan_in), +1/sqrt(fan_in)).
    Weights stored transposed as [in, out] so forward is y = x @ W + b."""
    ks = jax.random.split(key, 8)

    def linear(kw, kb, fan_in, fan_out):
        bound = 1.0 / jnp.sqrt(fan_in)
        w = jax.random.uniform(kw, (fan_in, fan_out), jnp.float32, -bound, bound)
        b = jax.random.uniform(kb, (1, fan_out), jnp.float32, -bound, bound)
        return w, b

    w1c, b1c = linear(ks[0], ks[1], n_states, hidden_dim)
    w2c, b2c = linear(ks[2], ks[3], hidden_dim, 1)
    w1a, b1a = linear(ks[4], ks[5], n_states, hidden_dim)
    w2a, b2a = linear(ks[6], ks[7], hidden_dim, n_actions)
    return dict(w1c=w1c, b1c=b1c, w2c=w2c, b2c=b2c,
                w1a=w1a, b1a=b1a, w2a=w2a, b2a=b2a)


def pack_params(params, n_states, n_actions, hidden_dim, compute_dtype=jnp.bfloat16):
    """Pack/pad the four Linear layers into two lane-aligned fused matrices."""
    assert 1 + n_actions <= LANE, "value + actions must fit one 128-lane slab"
    S_pad = _round_up(n_states, SUBLANE)
    H_pad = _round_up(hidden_dim, 128)       # 2*H_pad multiple of 256 (one MXU tile v6e/v7x)

    w1 = jnp.zeros((S_pad, 2 * H_pad), jnp.float32)
    w1 = w1.at[:n_states, :hidden_dim].set(params["w1c"])
    w1 = w1.at[:n_states, H_pad:H_pad + hidden_dim].set(params["w1a"])
    b1 = jnp.zeros((1, 2 * H_pad), jnp.float32)
    b1 = b1.at[:, :hidden_dim].set(params["b1c"])
    b1 = b1.at[:, H_pad:H_pad + hidden_dim].set(params["b1a"])

    w2 = jnp.zeros((2 * H_pad, LANE), jnp.float32)
    w2 = w2.at[:hidden_dim, 0:1].set(params["w2c"])
    w2 = w2.at[H_pad:H_pad + hidden_dim, 1:1 + n_actions].set(params["w2a"])
    # Bake the action-lane mask into the f32 bias: lanes [1+n_actions, 128) get
    # NEG_INF so their exp underflows to 0 inside the kernel (mask stays f32).
    b2 = jnp.full((1, LANE), NEG_INF, jnp.float32)
    b2 = b2.at[:, 0:1].set(params["b2c"])
    b2 = b2.at[:, 1:1 + n_actions].set(params["b2a"])

    return dict(w1=w1.astype(compute_dtype), b1=b1,
                w2=w2.astype(compute_dtype), b2=b2)


def reference_forward(state, params):
    hi = jax.lax.Precision.HIGHEST
    hc = jnp.maximum(jnp.dot(state, params["w1c"], precision=hi) + params["b1c"], 0.0)
    value = jnp.dot(hc, params["w2c"], precision=hi) + params["b2c"]
    ha = jnp.maximum(jnp.dot(state, params["w1a"], precision=hi) + params["b1a"], 0.0)
    policy = jax.nn.softmax(jnp.dot(ha, params["w2a"], precision=hi) + params["b2a"], axis=1)
    return value, policy


if __name__ == "__main__":
    n_states, n_actions, hidden_dim = 8, 4, 32

    key = jax.random.PRNGKey(0)
    k_params, k_state, k_batch = jax.random.split(key, 3)

    params = init_params(k_params, n_states, n_actions, hidden_dim)
    packed_f32 = pack_params(params, n_states, n_actions, hidden_dim, jnp.float32)
    packed_bf16 = pack_params(params, n_states, n_actions, hidden_dim, jnp.bfloat16)

    # --- single-state call (mirrors torch.from_numpy(state).float().unsqueeze(0)) ---
    state = jax.random.normal(k_state, (1, n_states), jnp.float32)
    xp = pad_state(state, n_states)                       # (8, 8)

    slab = actor_critic_forward_padded(xp, packed_f32)
    jax.block_until_ready(slab)
    value, policy = unpack_output(slab, 1, n_actions)
    ref_value, ref_policy = reference_forward(state, params)
    assert value.shape == (1, 1) and policy.shape == (1, n_actions)
    assert jnp.allclose(value, ref_value, atol=1e-3)
    assert jnp.allclose(policy, ref_policy, atol=1e-3)
    assert jnp.allclose(jnp.sum(policy, axis=1), 1.0, atol=1e-5)

    # bf16 MXU operands (v5e/v6e/v7x native): looser tolerance, exact normalization.
    slab16 = actor_critic_forward_padded(xp, packed_bf16)
    jax.block_until_ready(slab16)
    v16, p16 = unpack_output(slab16, 1, n_actions)
    assert jnp.allclose(v16, ref_value, atol=5e-2)
    assert jnp.allclose(p16, ref_policy, atol=3e-2)
    assert jnp.allclose(jnp.sum(p16, axis=1), 1.0, atol=1e-5)

    # --- batched rollout path: B=300 -> padded to 512 rows, TB=256, grid=(2,) ---
    B = 300
    batch = jax.random.normal(k_batch, (B, n_states), jnp.float32)
    xb = pad_state(batch, n_states)                       # (512, 8)
    slab_b = actor_critic_forward_padded(xb, packed_f32)
    jax.block_until_ready(slab_b)
    bval, bpol = unpack_output(slab_b, B, n_actions)
    rbval, rbpol = reference_forward(batch, params)
    assert bval.shape == (B, 1) and bpol.shape == (B, n_actions)
    assert jnp.allclose(bval, rbval, atol=1e-3)
    assert jnp.allclose(bpol, rbpol, atol=1e-3)
    assert jnp.allclose(jnp.sum(bpol, axis=1), 1.0, atol=1e-5)

    print("KERNEL_OK")
</pallas_src>

<mosaic_0001>
module attributes {stable_mosaic.version = 11 : i64} {
  func.func @actor_critic_kernel(%arg0: i32, %arg1: memref<8x8xf32, #tpu.memory_space<vmem>>, %arg2: memref<8x256xf32, #tpu.memory_space<vmem>>, %arg3: memref<1x256xf32, #tpu.memory_space<vmem>>, %arg4: memref<256x128xf32, #tpu.memory_space<vmem>>, %arg5: memref<1x128xf32, #tpu.memory_space<vmem>>, %arg6: memref<8x128xf32, #tpu.memory_space<vmem>>) attributes {dimension_semantics = [#tpu.dimension_semantics<parallel>], iteration_bounds = array<i64: 1>, scalar_prefetch = 0 : i64, scratch_operands = 0 : i64, tpu.core_type = #tpu.core_type<tc>, window_params = [{transform_indices = @transform_0, window_bounds = array<i64: 8, 8>}, {pipeline_mode = #tpu.pipeline_mode<synchronous>, transform_indices = @transform_1, window_bounds = array<i64: 8, 256>}, {pipeline_mode = #tpu.pipeline_mode<synchronous>, transform_indices = @transform_2, window_bounds = array<i64: 1, 256>}, {pipeline_mode = #tpu.pipeline_mode<synchronous>, transform_indices = @transform_3, window_bounds = array<i64: 256, 128>}, {pipeline_mode = #tpu.pipeline_mode<synchronous>, transform_indices = @transform_4, window_bounds = array<i64: 1, 128>}, {transform_indices = @transform_5, window_bounds = array<i64: 8, 128>}]} {
    %c0 = arith.constant 0 : index
    %c0_0 = arith.constant 0 : index
    %0 = vector.load %arg1[%c0, %c0_0] : memref<8x8xf32, #tpu.memory_space<vmem>>, vector<8x8xf32>
    %c0_1 = arith.constant 0 : index
    %c0_2 = arith.constant 0 : index
    %1 = vector.load %arg2[%c0_1, %c0_2] : memref<8x256xf32, #tpu.memory_space<vmem>>, vector<8x256xf32>
    %cst = arith.constant dense<0.000000e+00> : vector<8x256xf32>
    %2 = tpu.matmul %0, %1, %cst {dimension_numbers = #tpu.dot_dimension_numbers<[1], [0], [0], [1], [0, 0, 1, 1], [], []>} : vector<8x8xf32>, vector<8x256xf32>, vector<8x256xf32> -> vector<8x256xf32>
    %c0_3 = arith.constant 0 : index
    %c0_4 = arith.constant 0 : index
    %3 = vector.load %arg3[%c0_3, %c0_4] : memref<1x256xf32, #tpu.memory_space<vmem>>, vector<1x256xf32>
    %4 = vector.broadcast %3 : vector<1x256xf32> to vector<8x256xf32>
    %5 = arith.addf %2, %4 : vector<8x256xf32>
    %cst_5 = arith.constant 0.000000e+00 : f32
    %6 = vector.broadcast %cst_5 : f32 to vector<8x256xf32>
    %7 = arith.maximumf %5, %6 : vector<8x256xf32>
    %c0_6 = arith.constant 0 : index
    %c0_7 = arith.constant 0 : index
    %8 = vector.load %arg4[%c0_6, %c0_7] : memref<256x128xf32, #tpu.memory_space<vmem>>, vector<256x128xf32>
    %cst_8 = arith.constant dense<0.000000e+00> : vector<8x128xf32>
    %9 = tpu.matmul %7, %8, %cst_8 {dimension_numbers = #tpu.dot_dimension_numbers<[1], [0], [0], [1], [0, 0, 1, 1], [], []>} : vector<8x256xf32>, vector<256x128xf32>, vector<8x128xf32> -> vector<8x128xf32>
    %c0_9 = arith.constant 0 : index
    %c0_10 = arith.constant 0 : index
    %10 = vector.load %arg5[%c0_9, %c0_10] : memref<1x128xf32, #tpu.memory_space<vmem>>, vector<1x128xf32>
    %11 = vector.broadcast %10 : vector<1x128xf32> to vector<8x128xf32>
    %12 = arith.addf %9, %11 : vector<8x128xf32>
    %13 = tpu.iota {dimensions = array<i32: 1>} : vector<8x128xi32>
    %c0_i32 = arith.constant 0 : i32
    %14 = vector.broadcast %c0_i32 : i32 to vector<8x128xi32>
    %15 = arith.cmpi eq, %13, %14 : vector<8x128xi32>
    %cst_11 = arith.constant -1.000000e+30 : f32
    %16 = vector.broadcast %cst_11 : f32 to vector<8x128xf32>
    %17 = arith.select %15, %16, %12 : vector<8x128xi1>, vector<8x128xf32>
    %cst_12 = arith.constant dense<0xFF800000> : vector<8xf32>
    %18 = vector.multi_reduction <maximumf>, %17, %cst_12 [1] : vector<8x128xf32> to vector<8xf32>
    %19 = vector.shape_cast %18 : vector<8xf32> to vector<8x1xf32>
    %20 = vector.broadcast %19 : vector<8x1xf32> to vector<8x128xf32>
    %21 = arith.subf %17, %20 : vector<8x128xf32>
    %22 = math.exp %21 : vector<8x128xf32>
    %cst_13 = arith.constant dense<0.000000e+00> : vector<8xf32>
    %23 = vector.multi_reduction <add>, %22, %cst_13 [1] : vector<8x128xf32> to vector<8xf32>
    %24 = vector.shape_cast %23 : vector<8xf32> to vector<8x1xf32>
    %25 = vector.broadcast %24 : vector<8x1xf32> to vector<8x128xf32>
    %26 = arith.divf %22, %25 : vector<8x128xf32>
    %27 = arith.select %15, %12, %26 : vector<8x128xi1>, vector<8x128xf32>
    %c0_14 = arith.constant 0 : index
    %c0_15 = arith.constant 0 : index
    %28 = vector.load %arg6[%c0_14, %c0_15] : memref<8x128xf32, #tpu.memory_space<vmem>>, vector<8x128xf32>
    tpu.vector_store %arg6[%c0_14, %c0_15], %27 {strides = array<i32>} : memref<8x128xf32, #tpu.memory_space<vmem>>, vector<8x128xf32>,
    return
  }
  func.func @transform_0(%arg0: i32) -> (i32, i32) {
    %c0_i32 = arith.constant 0 : i32
    %c0_i32_0 = arith.constant 0 : i32
    return %arg0, %c0_i32 : i32, i32
  }
  func.func @transform_1(%arg0: i32) -> (i32, i32) {
    %c0_i32 = arith.constant 0 : i32
    %c0_i32_0 = arith.constant 0 : i32
    %c0_i32_1 = arith.constant 0 : i32
    return %c0_i32, %c0_i32_0 : i32, i32
  }
  func.func @transform_2(%arg0: i32) -> (i32, i32) {
    %c0_i32 = arith.constant 0 : i32
    %c0_i32_0 = arith.constant 0 : i32
    %c0_i32_1 = arith.constant 0 : i32
    return %c0_i32, %c0_i32_0 : i32, i32
  }
  func.func @transform_3(%arg0: i32) -> (i32, i32) {
    %c0_i32 = arith.constant 0 : i32
    %c0_i32_0 = arith.constant 0 : i32
    %c0_i32_1 = arith.constant 0 : i32
    return %c0_i32, %c0_i32_0 : i32, i32
  }
  func.func @transform_4(%arg0: i32) -> (i32, i32) {
    %c0_i32 = arith.constant 0 : i32
    %c0_i32_0 = arith.constant 0 : i32
    %c0_i32_1 = arith.constant 0 : i32
    return %c0_i32, %c0_i32_0 : i32, i32
  }
  func.func @transform_5(%arg0: i32) -> (i32, i32) {
    %c0_i32 = arith.constant 0 : i32
    %c0_i32_0 = arith.constant 0 : i32
    return %arg0, %c0_i32 : i32, i32
  }
}

</mosaic_0001>

<llo_original>
// kernel: actor_critic_forward_padded.1
$region0: #{actor_critic_forward_padded.1}
  #allocation0 [shape = 'u32[]', space=smem, size = 0x4, offset = 0x4, fixed_abs, tag = 'smem constant byte address 0x4 - core index']
  #allocation1 [shape = 'u32[144,128]{1,0:T(1,128)}', space=vmem, size = 0x12000, scoped, tag = 'internal scratch']
  %s0 = inlined_call_operand.hbm [shape: f32[8,8], index: 0, kind: input, shape index: {}]
  %s1 = inlined_call_operand.hbm [shape: f32[8,256], index: 1, kind: input, shape index: {}]
  %s2 = inlined_call_operand.hbm [shape: f32[1,256], index: 2, kind: input, shape index: {}]
  %s3 = inlined_call_operand.hbm [shape: f32[256,128], index: 3, kind: input, shape index: {}]
  %s4 = inlined_call_operand.vmem [shape: f32[1,128], index: 4, kind: input, shape index: {}]
  %s5 = inlined_call_operand.hbm [shape: f32[8,128], index: 5, kind: output, shape index: {}]
  %s6 = sld [smem:[#allocation0]]
  $region46: #{actor_critic_forward_padded.1} parent=0
    _
  %s8 = ssub.s32 1, %s6
  %s9 = scalar_select 0, %s8, %s6
  $region1: #{actor_critic_forward_padded.1} parent=0
    #allocation2 [shape = 'u8[4096]{0}', space=vmem, size = 0x1000, scoped, tag = 'input window, operand 0, single buffered']
    #allocation3 [shape = 's32[1]{0}', space=sflag, size = 0x4, scoped, tag = 'scoped memory for actor_critic_forward_padded.1']
    #allocation4 [shape = 's32[1]{0}', space=sflag, size = 0x4, scoped, tag = 'scoped memory for actor_critic_forward_padded.1']
    #allocation5 [shape = 'u8[8192]{0}', space=vmem, size = 0x2000, scoped, tag = 'input window, operand 1, single buffered']
    #allocation6 [shape = 's32[1]{0}', space=sflag, size = 0x4, scoped, tag = 'scoped memory for actor_critic_forward_padded.1']
    #allocation7 [shape = 'u8[1024]{0}', space=vmem, size = 0x400, scoped, tag = 'input window, operand 2, single buffered']
    #allocation8 [shape = 'u8[131072]{0}', space=vmem, size = 0x20000, scoped, tag = 'input window, operand 3, single buffered']
    #allocation9 [shape = 's32[1]{0}', space=sflag, size = 0x4, scoped, tag = 'scoped memory for actor_critic_forward_padded.1']
    #allocation10 [shape = 'u8[4096]{0}', space=vmem, size = 0x1000, scoped, tag = 'output window, operand 0, single buffered']
    %10 = vsyncpa [#allocation3], 0
    %11 = vsyncpa [#allocation6], 0
    %12 = vsyncpa [#allocation9], 0
    %13 = vsyncpa [#allocation4], 0
    // Predicated region
    $region2: #{actor_critic_forward_padded.1} parent=1 // pred_check
      _
    $region3: #{actor_critic_forward_padded.1} parent=1 // pred_check_branch
      %15 = sbr.rel (0) target = $region5
    $region4: #{actor_critic_forward_padded.1} parent=1 // pred_region
      %s17 = ssub.s32 128, 128
      %18 = vsyncadd [#allocation3], %s17
      %s20 = sshll.u32 [#allocation2], 4
      %s21 = int_to_ptr.vmem [resolvable:$true] %s20
      %23 = dma.hbm_to_vmem [thread:$0]  %s0, 128, %s21, [#allocation3]
    $region5: #{actor_critic_forward_padded.1} parent=1 // pred_fallthru
      _
    // Predicated region
    $region6: #{actor_critic_forward_padded.1} parent=1 // pred_check
      _
    $region7: #{actor_critic_forward_padded.1} parent=1 // pred_check_branch
      %25 = sbr.rel (0) target = $region9
    $region8: #{actor_critic_forward_padded.1} parent=1 // pred_region
      %s27 = ssub.s32 256, 256
      %28 = vsyncadd [#allocation6], %s27
      %s30 = sshll.u32 [#allocation5], 4
      %s31 = int_to_ptr.vmem [resolvable:$true] %s30
      %33 = dma.hbm_to_vmem [thread:$0]  %s1, 256, %s31, [#allocation6]
    $region9: #{actor_critic_forward_padded.1} parent=1 // pred_fallthru
      _
    // Predicated region
    $region10: #{actor_critic_forward_padded.1} parent=1 // pred_check
      _
    $region11: #{actor_critic_forward_padded.1} parent=1 // pred_check_branch
      %35 = sbr.rel (0) target = $region13
    $region12: #{actor_critic_forward_padded.1} parent=1 // pred_region
      %s37 = ssub.s32 32, 32
      %38 = vsyncadd [#allocation6], %s37
      %s40 = sshll.u32 [#allocation7], 4
      %s41 = int_to_ptr.vmem [resolvable:$true] %s40
      %43 = dma.hbm_to_vmem [thread:$0]  %s2, 32, %s41, [#allocation6]
    $region13: #{actor_critic_forward_padded.1} parent=1 // pred_fallthru
      _
    // Predicated region
    $region14: #{actor_critic_forward_padded.1} parent=1 // pred_check
      _
    $region15: #{actor_critic_forward_padded.1} parent=1 // pred_check_branch
      %45 = sbr.rel (0) target = $region17
    $region16: #{actor_critic_forward_padded.1} parent=1 // pred_region
      %s47 = ssub.s32 4096, 4096
      %48 = vsyncadd [#allocation9], %s47
      %s49 = sshll.u32 [#allocation8], 4
      %s50 = int_to_ptr.vmem [resolvable:$true] %s49
      %55 = dma.hbm_to_vmem [thread:$0]  %s3, 4096, %s50, [#allocation9], 128, 128, 8
    $region17: #{actor_critic_forward_padded.1} parent=1 // pred_fallthru
      _
    // Predicated region
    $region18: #{actor_critic_forward_padded.1} parent=1 // pred_check
      _
    $region19: #{actor_critic_forward_padded.1} parent=1 // pred_check_branch
      %57 = sbr.rel (0) target = $region21
    $region20: #{actor_critic_forward_padded.1} parent=1 // pred_region
      _
    $region21: #{actor_critic_forward_padded.1} parent=1 // pred_fallthru
      _
    // Predicated region
    $region22: #{actor_critic_forward_padded.1} parent=1 // pred_check
      _
    $region23: #{actor_critic_forward_padded.1} parent=1 // pred_check_branch
      %59 = sbr.rel (0) target = $region25
    $region24: #{actor_critic_forward_padded.1} parent=1 // pred_region
      %60 = dma.done [#allocation3], 128
    $region25: #{actor_critic_forward_padded.1} parent=1 // pred_fallthru
      _
    // Predicated region
    $region26: #{actor_critic_forward_padded.1} parent=1 // pred_check
      _
    $region27: #{actor_critic_forward_padded.1} parent=1 // pred_check_branch
      %62 = sbr.rel (0) target = $region29
    $region28: #{actor_critic_forward_padded.1} parent=1 // pred_region
      %63 = dma.done [#allocation6], 256
    $region29: #{actor_critic_forward_padded.1} parent=1 // pred_fallthru
      _
    // Predicated region
    $region30: #{actor_critic_forward_padded.1} parent=1 // pred_check
      _
    $region31: #{actor_critic_forward_padded.1} parent=1 // pred_check_branch
      %65 = sbr.rel (0) target = $region33
    $region32: #{actor_critic_forward_padded.1} parent=1 // pred_region
      %66 = dma.done [#allocation6], 32
    $region33: #{actor_critic_forward_padded.1} parent=1 // pred_fallthru
      _
    // Predicated region
    $region34: #{actor_critic_forward_padded.1} parent=1 // pred_check
      _
    $region35: #{actor_critic_forward_padded.1} parent=1 // pred_check_branch
      %68 = sbr.rel (0) target = $region37
    $region36: #{actor_critic_forward_padded.1} parent=1 // pred_region
      %69 = dma.done [#allocation9], 4096
    $region37: #{actor_critic_forward_padded.1} parent=1 // pred_fallthru
      _
    %v70 = vld [vmem:[#allocation2] sm:$0xff]
    %v71 = vld [vmem:[#allocation5] sm:$0xff]
    %v72 = vld [vmem:[#allocation5 + $0x8] sm:$0xff]
    %v73 = vld [vmem:[#allocation7] sm:$0x3]
    %v75 = vlaneseq
    %v76 = vshrl.u32 %v75, 7
    %v77 = vsub.s32 0, %v76
    %v78 = vrot.slane %v73, %v77
    %v79 = vlaneseq
    %v80 = vshrl.u32 %v79, 7
    %v81 = vsub.s32 1, %v80
    %v82 = vrot.slane %v73, %v81
    %vm85 = vcmask 64512
    %v87 = vsel %vm85, %v70, 0
    %89 = vmatprep.subr.mxu0 0.0
    %90 = vmatpush1.msra.mxu0 0.0
    %91 = vmatprep.subr.mxu0 0.0
    %92 = vmatpush1.msra.mxu0 0.0
    %93 = vmatprep.subr.mxu0 0.0
    %94 = vmatpush1.msra.mxu0 0.0
    %95 = vmatprep.subr.mxu0 0.0
    %96 = vmatpush1.msra.mxu0 0.0
    %97 = vmatprep.subr.mxu0 0.0
    %98 = vmatpush1.msra.mxu0 0.0
    %99 = vmatprep.subr.mxu0 0.0
    %100 = vmatpush1.msra.mxu0 0.0
    %101 = vmatprep.subr.mxu0 0.0
    %102 = vmatpush1.msra.mxu0 0.0
    %103 = vmatprep.subr.mxu0 0.0
    %104 = vmatpush1.msra.mxu0 0.0
    %105 = vmatprep.subr.mxu0 0.0
    %106 = vmatpush1.msra.mxu0 0.0
    %107 = vmatprep.subr.mxu0 0.0
    %108 = vmatpush1.msra.mxu0 0.0
    %109 = vmatprep.subr.mxu0 0.0
    %110 = vmatpush1.msra.mxu0 0.0
    %111 = vmatprep.subr.mxu0 0.0
    %112 = vmatpush1.msra.mxu0 0.0
    %113 = vmatprep.subr.mxu0 0.0
    %114 = vmatpush1.msra.mxu0 0.0
    %115 = vmatprep.subr.mxu0 0.0
    %116 = vmatpush1.msra.mxu0 0.0
    %117 = vmatprep.subr.mxu0 0.0
    %118 = vmatpush1.msra.mxu0 0.0
    %119 = vmatprep.subr.mxu0 %v72
    %120 = vmatpush1.msra.mxu0 %v71
    %121 = vmatprep.subr.mxu0 0.0
    %122 = vmatpush2.msra.mxu0 0.0
    %123 = vmatprep.subr.mxu0 0.0
    %124 = vmatpush2.msra.mxu0 0.0
    %125 = vmatprep.subr.mxu0 0.0
    %126 = vmatpush2.msra.mxu0 0.0
    %127 = vmatprep.subr.mxu0 0.0
    %128 = vmatpush2.msra.mxu0 0.0
    %129 = vmatprep.subr.mxu0 0.0
    %130 = vmatpush2.msra.mxu0 0.0
    %131 = vmatprep.subr.mxu0 0.0
    %132 = vmatpush2.msra.mxu0 0.0
    %133 = vmatprep.subr.mxu0 0.0
    %134 = vmatpush2.msra.mxu0 0.0
    %135 = vmatprep.subr.mxu0 0.0
    %136 = vmatpush2.msra.mxu0 0.0
    %137 = vmatprep.subr.mxu0 0.0
    %138 = vmatpush2.msra.mxu0 0.0
    %139 = vmatprep.subr.mxu0 0.0
    %140 = vmatpush2.msra.mxu0 0.0
    %141 = vmatprep.subr.mxu0 0.0
    %142 = vmatpush2.msra.mxu0 0.0
    %143 = vmatprep.subr.mxu0 0.0
    %144 = vmatpush2.msra.mxu0 0.0
    %145 = vmatprep.subr.mxu0 0.0
    %146 = vmatpush2.msra.mxu0 0.0
    %147 = vmatprep.subr.mxu0 0.0
    %148 = vmatpush2.msra.mxu0 0.0
    %149 = vmatprep.subr.mxu0 0.0
    %150 = vmatpush2.msra.mxu0 0.0
    %151 = vmatprep.subr.mxu0 0.0
    %152 = vmatpush2.msra.mxu0 0.0
    %153 = vmatprep.mubr.f32.mxu0 0.0
    %154 = vmatmul.mubr.f32.gmra.mxu0 %v87
    %v155 = vpop.f32.mrf.mxu0
    %v156 = vadd.f32 %v78, %v155
    %v157 = vpop.f32.mrf.mxu0
    %v158 = vadd.f32 %v82, %v157
    %159 = vdwg.mxu0
    %v160 = vmax.f32 %v156, 0.0
    %v161 = vmax.f32 %v158, 0.0
    %v162 = vld [vmem:[#allocation8] sm:$0xff]
    %v163 = vld [vmem:[#allocation8 + $0x8] sm:$0xff]
    %v164 = vld [vmem:[#allocation8 + $0x10] sm:$0xff]
    %v165 = vld [vmem:[#allocation8 + $0x18] sm:$0xff]
    %v166 = vld [vmem:[#allocation8 + $0x20] sm:$0xff]
    %v167 = vld [vmem:[#allocation8 + $0x28] sm:$0xff]
    %v168 = vld [vmem:[#allocation8 + $0x30] sm:$0xff]
    %v169 = vld [vmem:[#allocation8 + $0x38] sm:$0xff]
    %v170 = vld [vmem:[#allocation8 + $0x40] sm:$0xff]
    %v171 = vld [vmem:[#allocation8 + $0x48] sm:$0xff]
    %v172 = vld [vmem:[#allocation8 + $0x50] sm:$0xff]
    %v173 = vld [vmem:[#allocation8 + $0x58] sm:$0xff]
    %v174 = vld [vmem:[#allocation8 + $0x60] sm:$0xff]
    %v175 = vld [vmem:[#allocation8 + $0x68] sm:$0xff]
    %v176 = vld [vmem:[#allocation8 + $0x70] sm:$0xff]
    %v177 = vld [vmem:[#allocation8 + $0x78] sm:$0xff]
    %v178 = vld [vmem:[#allocation8 + $0x80] sm:$0xff]
    %v179 = vld [vmem:[#allocation8 + $0x88] sm:$0xff]
    %v180 = vld [vmem:[#allocation8 + $0x90] sm:$0xff]
    %v181 = vld [vmem:[#allocation8 + $0x98] sm:$0xff]
    %v182 = vld [vmem:[#allocation8 + $0xa0] sm:$0xff]
    %v183 = vld [vmem:[#allocation8 + $0xa8] sm:$0xff]
    %v184 = vld [vmem:[#allocation8 + $0xb0] sm:$0xff]
    %v185 = vld [vmem:[#allocation8 + $0xb8] sm:$0xff]
    %v186 = vld [vmem:[#allocation8 + $0xc0] sm:$0xff]
    %v187 = vld [vmem:[#allocation8 + $0xc8] sm:$0xff]
    %v188 = vld [vmem:[#allocation8 + $0xd0] sm:$0xff]
    %v189 = vld [vmem:[#allocation8 + $0xd8] sm:$0xff]
    %v190 = vld [vmem:[#allocation8 + $0xe0] sm:$0xff]
    %v191 = vld [vmem:[#allocation8 + $0xe8] sm:$0xff]
    %v192 = vld [vmem:[#allocation8 + $0xf0] sm:$0xff]
    %v193 = vld [vmem:[#allocation8 + $0xf8] sm:$0xff]
    %v194 = vld [vmem:[%s4] sm:$0x1]
    %v196 = vlaneseq
    %v197 = vshrl.u32 %v196, 7
    %v198 = vsub.s32 0, %v197
    %v199 = vrot.slane %v194, %v198
    %201 = vmatprep.subr.mxu0 0.0
    %202 = vmatpush1.msra.mxu0 %v177
    %203 = vmatprep.subr.mxu0 0.0
    %204 = vmatpush1.msra.mxu0 %v176
    %205 = vmatprep.subr.mxu0 0.0
    %206 = vmatpush1.msra.mxu0 %v175
    %207 = vmatprep.subr.mxu0 0.0
    %208 = vmatpush1.msra.mxu0 %v174
    %209 = vmatprep.subr.mxu0 0.0
    %210 = vmatpush1.msra.mxu0 %v173
    %211 = vmatprep.subr.mxu0 0.0
    %212 = vmatpush1.msra.mxu0 %v172
    %213 = vmatprep.subr.mxu0 0.0
    %214 = vmatpush1.msra.mxu0 %v171
    %215 = vmatprep.subr.mxu0 0.0
    %216 = vmatpush1.msra.mxu0 %v170
    %217 = vmatprep.subr.mxu0 0.0
    %218 = vmatpush1.msra.mxu0 %v169
    %219 = vmatprep.subr.mxu0 0.0
    %220 = vmatpush1.msra.mxu0 %v168
    %221 = vmatprep.subr.mxu0 0.0
    %222 = vmatpush1.msra.mxu0 %v167
    %223 = vmatprep.subr.mxu0 0.0
    %224 = vmatpush1.msra.mxu0 %v166
    %225 = vmatprep.subr.mxu0 0.0
    %226 = vmatpush1.msra.mxu0 %v165
    %227 = vmatprep.subr.mxu0 0.0
    %228 = vmatpush1.msra.mxu0 %v164
    %229 = vmatprep.subr.mxu0 0.0
    %230 = vmatpush1.msra.mxu0 %v163
    %231 = vmatprep.subr.mxu0 0.0
    %232 = vmatpush1.msra.mxu0 %v162
    %233 = vmatprep.subr.mxu0 0.0
    %234 = vmatpush2.msra.mxu0 %v193
    %235 = vmatprep.subr.mxu0 0.0
    %236 = vmatpush2.msra.mxu0 %v192
    %237 = vmatprep.subr.mxu0 0.0
    %238 = vmatpush2.msra.mxu0 %v191
    %239 = vmatprep.subr.mxu0 0.0
    %240 = vmatpush2.msra.mxu0 %v190
    %241 = vmatprep.subr.mxu0 0.0
    %242 = vmatpush2.msra.mxu0 %v189
    %243 = vmatprep.subr.mxu0 0.0
    %244 = vmatpush2.msra.mxu0 %v188
    %245 = vmatprep.subr.mxu0 0.0
    %246 = vmatpush2.msra.mxu0 %v187
    %247 = vmatprep.subr.mxu0 0.0
    %248 = vmatpush2.msra.mxu0 %v186
    %249 = vmatprep.subr.mxu0 0.0
    %250 = vmatpush2.msra.mxu0 %v185
    %251 = vmatprep.subr.mxu0 0.0
    %252 = vmatpush2.msra.mxu0 %v184
    %253 = vmatprep.subr.mxu0 0.0
    %254 = vmatpush2.msra.mxu0 %v183
    %255 = vmatprep.subr.mxu0 0.0
    %256 = vmatpush2.msra.mxu0 %v182
    %257 = vmatprep.subr.mxu0 0.0
    %258 = vmatpush2.msra.mxu0 %v181
    %259 = vmatprep.subr.mxu0 0.0
    %260 = vmatpush2.msra.mxu0 %v180
    %261 = vmatprep.subr.mxu0 0.0
    %262 = vmatpush2.msra.mxu0 %v179
    %263 = vmatprep.subr.mxu0 0.0
    %264 = vmatpush2.msra.mxu0 %v178
    %265 = vmatprep.mubr.f32.mxu0 %v161
    %266 = vmatmul.mubr.f32.gmra.mxu0 %v160
    %v267 = vpop.f32.mrf.mxu0
    %v268 = vadd.f32 %v199, %v267
    %v269 = vpop.f32.mrf.mxu0
    %270 = vdwg.mxu0
    %v271 = vlaneseq
    %v272 = vand.u32 %v271, 127
    %vm273 = vcmp.eq.s32.totalorder %v272, 0
    %v274 = vsel %vm273, -1e+30, %v268
    %275 = vmax.xlane.f32.xlu0 %v274
    %v276 = vpop.xlane.xlu0 %275
    %v277 = vsub.f32 %v274, %v276
    %v278 = vmul.f32 %v277, 1.442695
    %v279 = vpow.pop %v278
    %280 = vadd.xlane.f32.xlu0 %v279
    %v281 = vpop.xlane.xlu0 %280
    %v282 = vrcp.pop %v281
    %v283 = vmul.f32 %v279, %v282
    %v284 = vsel %vm273, %v268, %v283
    %285 = vst [vmem:[#allocation10] sm:$0xff] %v284
    // Predicated region
    $region38: #{actor_critic_forward_padded.1} parent=1 // pred_check
      _
    $region39: #{actor_critic_forward_padded.1} parent=1 // pred_check_branch
      %287 = sbr.rel (0) target = $region41
    $region40: #{actor_critic_forward_padded.1} parent=1 // pred_region
      %s289 = ssub.s32 128, 128
      %290 = vsyncadd [#allocation4], %s289
      %s292 = sshll.u32 [#allocation10], 4
      %s293 = int_to_ptr.vmem [resolvable:$true] %s292
      %295 = dma.vmem_to_hbm [thread:$0]  %s293, 128, %s5, [#allocation4]
    $region41: #{actor_critic_forward_padded.1} parent=1 // pred_fallthru
      _
    // Predicated region
    $region42: #{actor_critic_forward_padded.1} parent=1 // pred_check
      _
    $region43: #{actor_critic_forward_padded.1} parent=1 // pred_check_branch
      %297 = sbr.rel (0) target = $region45
    $region44: #{actor_critic_forward_padded.1} parent=1 // pred_region
      %298 = dma.done [#allocation4], 128
    $region45: #{actor_critic_forward_padded.1} parent=1 // pred_fallthru
      _
    %299 = vsyncpa [#allocation3], 1
    %300 = vsyncpa [#allocation6], 1
    %301 = vsyncpa [#allocation9], 1
    %302 = vsyncpa [#allocation4], 1

</llo_original>
